<compile_context>
chip_gen: v6e
topology: v6e:2x2x1
jax: 0.10.0
libtpu: 0.0.40
codegen_flags: <defaults>
</compile_context>

<pallas_src>
import math

import jax
import jax.numpy as jnp
from jax.experimental import pallas as pl
from jax.experimental.pallas import tpu as pltpu


def _cfg_denoise_kernel(cfg_ref,
                        x_ref, cond_ref, temb_ref,
                        w_in_t_ref, b_in_ref,
                        w_c_t_ref, b_c_ref,
                        w_h_t_ref, b_h_ref,
                        w_out_t_ref, b_out_ref,
                        out_ref):
    cfg = cfg_ref[0]                 # scalar guidance scale (SMEM)

    x = x_ref[...]                   # [M,  Tt]  channels-first, T lane-dense
    cond = cond_ref[...]             # [Hc, Tt]
    temb = temb_ref[...]             # [H,  1]   broadcast over frames

    w_in_t = w_in_t_ref[...]         # [H, M]
    b_in = b_in_ref[...]             # [H, 1]
    w_c_t = w_c_t_ref[...]           # [H, Hc]
    b_c = b_c_ref[...]               # [H, 1]
    w_h_t = w_h_t_ref[...]           # [H, H]
    b_h = b_h_ref[...]               # [H, 1]
    w_out_t = w_out_t_ref[...]       # [M, H]
    b_out = b_out_ref[...]           # [M, 1]

    # input projection (1x1 conv over mel bins) — shared by both CFG branches
    h0 = jnp.maximum(
        jnp.dot(w_in_t, x, preferred_element_type=jnp.float32) + b_in, 0.0)   # [H, Tt]

    # uncond branch feeds cond == zeros, so W_c^T @ 0 == 0 exactly: skip that dot
    base = h0 + temb + b_c                                                     # [H, Tt]
    h_u = base
    h_c = base + jnp.dot(w_c_t, cond, preferred_element_type=jnp.float32)

    h_u = jnp.maximum(
        jnp.dot(w_h_t, h_u, preferred_element_type=jnp.float32) + b_h, 0.0)
    h_c = jnp.maximum(
        jnp.dot(w_h_t, h_c, preferred_element_type=jnp.float32) + b_h, 0.0)

    # CFG blend in hidden space: the output layer is linear, so
    # (h_u + cfg*(h_c-h_u)) @ W_out + b_out == v_u + cfg*(v_c - v_u).
    h_blend = h_u + cfg * (h_c - h_u)                                          # [H, Tt]

    v = jnp.dot(w_out_t, h_blend, preferred_element_type=jnp.float32) + b_out  # [M, Tt]
    out_ref[...] = v.astype(out_ref.dtype)


def _timestep_embedding(t_long, dim):
    """Sinusoidal diffusion-step embedding (tiny glue, stays in plain JAX)."""
    half = dim // 2
    freqs = jnp.exp(
        -math.log(10000.0) * jnp.arange(half, dtype=jnp.float32) / (half - 1))
    args = t_long.astype(jnp.float32)[:, None] * freqs[None, :]
    return jnp.concatenate([jnp.sin(args), jnp.cos(args)], axis=-1)   # [B, dim]


def _pick_t_tile(T):
    """Lane-dense T tile that divides T; fall back to the full extent."""
    for cand in (2048, 1024, 512, 256, 128):
        if T % cand == 0:
            return cand
    return T


def wrapper_cfg_forward(t, x_nchw, cond_nct, params, cfg_scale):
    """Pallas implementation of Wrapper_CFG.forward(t, x, args).

    t        : python float (ODE time)
    x_nchw   : [B, 1, M, T]
    cond_nct : [B, Hc, T]
    returns  : [B, 1, M, T]
    """
    B, _, M, T = x_nchw.shape
    Hc = cond_nct.shape[1]
    H = params["W_h"].shape[0]

    # t = torch.tensor([t * 100] * B).long()
    t_long = jnp.full((B,), t * 100.0, dtype=jnp.float32).astype(jnp.int32)

    # diffusion-step embedding MLP (glue: [B, H], negligible compute)
    temb = _timestep_embedding(t_long, H) @ params["W_t"] + params["b_t"]   # [B, H]
    temb = temb.reshape(B, H, 1)                                            # channels-first

    # NCHW is already channels-first — no transposes needed for the kernel layout.
    x_bmt = x_nchw[:, 0, :, :]            # [B, M, T]
    # cond_nct is already [B, Hc, T]

    # channels-first (transposed) weights / column biases — tiny one-time ops.
    w_in_t = params["W_in"].T             # [H, M]
    w_c_t = params["W_c"].T               # [H, Hc]
    w_h_t = params["W_h"].T               # [H, H]
    w_out_t = params["W_out"].T           # [M, H]
    b_in = params["b_in"].reshape(H, 1)
    b_c = params["b_c"].reshape(H, 1)
    b_h = params["b_h"].reshape(H, 1)
    b_out = params["b_out"].reshape(M, 1)

    cfg = jnp.asarray([cfg_scale], dtype=jnp.float32)   # SMEM scalar (no recompile)

    tile_t = _pick_t_tile(T)
    grid = (B, T // tile_t)

    out_bmt = pl.pallas_call(
        _cfg_denoise_kernel,
        out_shape=jax.ShapeDtypeStruct((B, M, T), x_nchw.dtype),
        grid_spec=pltpu.PrefetchScalarGridSpec(
            num_scalar_prefetch=0,
            grid=grid,
            in_specs=[
                pl.BlockSpec(memory_space=pltpu.MemorySpace.SMEM),              # cfg_scale
                pl.BlockSpec((None, M, tile_t), lambda b, j: (b, 0, j)),        # x
                pl.BlockSpec((None, Hc, tile_t), lambda b, j: (b, 0, j)),       # cond
                pl.BlockSpec((None, H, 1), lambda b, j: (b, 0, 0)),             # t embedding
                pl.BlockSpec((H, M), lambda b, j: (0, 0)),                      # W_in^T
                pl.BlockSpec((H, 1), lambda b, j: (0, 0)),                      # b_in
                pl.BlockSpec((H, Hc), lambda b, j: (0, 0)),                     # W_c^T
                pl.BlockSpec((H, 1), lambda b, j: (0, 0)),                      # b_c
                pl.BlockSpec((H, H), lambda b, j: (0, 0)),                      # W_h^T
                pl.BlockSpec((H, 1), lambda b, j: (0, 0)),                      # b_h
                pl.BlockSpec((M, H), lambda b, j: (0, 0)),                      # W_out^T
                pl.BlockSpec((M, 1), lambda b, j: (0, 0)),                      # b_out
            ],
            out_specs=pl.BlockSpec((None, M, tile_t), lambda b, j: (b, 0, j)),
        ),
        compiler_params=pltpu.CompilerParams(
            dimension_semantics=("parallel", "parallel")),
    )(cfg, x_bmt, cond_nct, temb,
      w_in_t, b_in, w_c_t, b_c, w_h_t, b_h, w_out_t, b_out)

    # [B, M, T] -> [B, 1, M, T]  (no transpose needed)
    return out_bmt[:, None, :, :]


def _reference_forward(t, x_nchw, cond_nct, params, cfg_scale):
    """Pure-JAX reference that literally does cat / chunk like the PyTorch code."""
    B, _, M, T = x_nchw.shape
    H = params["W_h"].shape[0]
    t_long = jnp.full((B,), t * 100.0, dtype=jnp.float32).astype(jnp.int32)
    temb = _timestep_embedding(t_long, H) @ params["W_t"] + params["b_t"]

    uncond = jnp.zeros_like(cond_nct)
    cond_in = jnp.concatenate([uncond, cond_nct], axis=0)        # [2B, Hc, T]
    temb_in = jnp.concatenate([temb, temb], axis=0)              # [2B, H]
    x_in = jnp.concatenate([x_nchw, x_nchw], axis=0)             # [2B, 1, M, T]

    xb = jnp.transpose(x_in[:, 0], (0, 2, 1))                    # [2B, T, M]
    cb = jnp.transpose(cond_in, (0, 2, 1))                       # [2B, T, Hc]
    h = jax.nn.relu(xb @ params["W_in"] + params["b_in"])
    h = h + temb_in[:, None, :] + cb @ params["W_c"] + params["b_c"]
    h = jax.nn.relu(h @ params["W_h"] + params["b_h"])
    v = h @ params["W_out"] + params["b_out"]                    # [2B, T, M]
    v = jnp.transpose(v, (0, 2, 1))[:, None, :, :]               # [2B, 1, M, T]
    v_uncond, v_cond = v[:B], v[B:]
    return v_uncond + cfg_scale * (v_cond - v_uncond)


if __name__ == "__main__":
    B, M, T, Hc, H = 2, 16, 16, 32, 32

    key = jax.random.PRNGKey(0)
    ks = jax.random.split(key, 12)
    x = jax.random.normal(ks[0], (B, 1, M, T), jnp.float32)
    cond = jax.random.normal(ks[1], (B, Hc, T), jnp.float32)

    s = 0.05
    params = {
        "W_t":   s * jax.random.normal(ks[2], (H, H), jnp.float32),
        "b_t":   s * jax.random.normal(ks[3], (H,), jnp.float32),
        "W_in":  s * jax.random.normal(ks[4], (M, H), jnp.float32),
        "b_in":  (s * jax.random.normal(ks[5], (H,), jnp.float32)).reshape(1, H),
        "W_c":   s * jax.random.normal(ks[6], (Hc, H), jnp.float32),
        "b_c":   (s * jax.random.normal(ks[7], (H,), jnp.float32)).reshape(1, H),
        "W_h":   s * jax.random.normal(ks[8], (H, H), jnp.float32),
        "b_h":   (s * jax.random.normal(ks[9], (H,), jnp.float32)).reshape(1, H),
        "W_out": s * jax.random.normal(ks[10], (H, M), jnp.float32),
        "b_out": (s * jax.random.normal(ks[11], (M,), jnp.float32)).reshape(1, M),
    }

    t = 0.37          # ODE time in [0, 1]
    cfg_scale = 2.5   # classifier-free guidance scale

    v_out = wrapper_cfg_forward(t, x, cond, params, cfg_scale)
    v_out = jax.block_until_ready(v_out)
    assert v_out.shape == x.shape and v_out.dtype == x.dtype

    v_ref = _reference_forward(t, x, cond, params, cfg_scale)
    assert jnp.allclose(v_out, v_ref, atol=1e-4, rtol=1e-4)

    print("KERNEL_OK")
</pallas_src>

<mosaic_0001>
module attributes {stable_mosaic.version = 11 : i64} {
  func.func @_cfg_denoise_kernel(%arg0: i32, %arg1: i32, %arg2: memref<1xf32, #tpu.memory_space<smem>>, %arg3: memref<1x16x16xf32, #tpu.memory_space<vmem>>, %arg4: memref<1x32x16xf32, #tpu.memory_space<vmem>>, %arg5: memref<1x32x1xf32, #tpu.memory_space<vmem>>, %arg6: memref<32x16xf32, #tpu.memory_space<vmem>>, %arg7: memref<32x1xf32, #tpu.memory_space<vmem>>, %arg8: memref<32x32xf32, #tpu.memory_space<vmem>>, %arg9: memref<32x1xf32, #tpu.memory_space<vmem>>, %arg10: memref<32x32xf32, #tpu.memory_space<vmem>>, %arg11: memref<32x1xf32, #tpu.memory_space<vmem>>, %arg12: memref<16x32xf32, #tpu.memory_space<vmem>>, %arg13: memref<16x1xf32, #tpu.memory_space<vmem>>, %arg14: memref<1x16x16xf32, #tpu.memory_space<vmem>>) attributes {dimension_semantics = [#tpu.dimension_semantics<parallel>, #tpu.dimension_semantics<parallel>], iteration_bounds = array<i64: 2, 1>, scalar_prefetch = 0 : i64, scratch_operands = 0 : i64, tpu.core_type = #tpu.core_type<tc>, window_params = [{transform_indices = @transform_0, window_bounds = array<i64: 1>}, {transform_indices = @transform_1, window_bounds = array<i64: 1, 16, 16>}, {transform_indices = @transform_2, window_bounds = array<i64: 1, 32, 16>}, {transform_indices = @transform_3, window_bounds = array<i64: 1, 32, 1>}, {pipeline_mode = #tpu.pipeline_mode<synchronous>, transform_indices = @transform_4, window_bounds = array<i64: 32, 16>}, {pipeline_mode = #tpu.pipeline_mode<synchronous>, transform_indices = @transform_5, window_bounds = array<i64: 32, 1>}, {pipeline_mode = #tpu.pipeline_mode<synchronous>, transform_indices = @transform_6, window_bounds = array<i64: 32, 32>}, {pipeline_mode = #tpu.pipeline_mode<synchronous>, transform_indices = @transform_7, window_bounds = array<i64: 32, 1>}, {pipeline_mode = #tpu.pipeline_mode<synchronous>, transform_indices = @transform_8, window_bounds = array<i64: 32, 32>}, {pipeline_mode = #tpu.pipeline_mode<synchronous>, transform_indices = @transform_9, window_bounds = array<i64: 32, 1>}, {pipeline_mode = #tpu.pipeline_mode<synchronous>, transform_indices = @transform_10, window_bounds = array<i64: 16, 32>}, {pipeline_mode = #tpu.pipeline_mode<synchronous>, transform_indices = @transform_11, window_bounds = array<i64: 16, 1>}, {transform_indices = @transform_12, window_bounds = array<i64: 1, 16, 16>}]} {
    %c0 = arith.constant 0 : index
    %0 = memref.load %arg2[%c0] : memref<1xf32, #tpu.memory_space<smem>>
    %c0_0 = arith.constant 0 : index
    %c0_1 = arith.constant 0 : index
    %c0_2 = arith.constant 0 : index
    %1 = vector.load %arg3[%c0_0, %c0_1, %c0_2] : memref<1x16x16xf32, #tpu.memory_space<vmem>>, vector<1x16x16xf32>
    %2 = vector.shape_cast %1 : vector<1x16x16xf32> to vector<16x16xf32>
    %c0_3 = arith.constant 0 : index
    %c0_4 = arith.constant 0 : index
    %c0_5 = arith.constant 0 : index
    %3 = vector.load %arg4[%c0_3, %c0_4, %c0_5] : memref<1x32x16xf32, #tpu.memory_space<vmem>>, vector<1x32x16xf32>
    %4 = vector.shape_cast %3 : vector<1x32x16xf32> to vector<32x16xf32>
    %c0_6 = arith.constant 0 : index
    %c0_7 = arith.constant 0 : index
    %c0_8 = arith.constant 0 : index
    %5 = vector.load %arg5[%c0_6, %c0_7, %c0_8] : memref<1x32x1xf32, #tpu.memory_space<vmem>>, vector<1x32x1xf32>
    %6 = vector.shape_cast %5 : vector<1x32x1xf32> to vector<32x1xf32>
    %c0_9 = arith.constant 0 : index
    %c0_10 = arith.constant 0 : index
    %7 = vector.load %arg6[%c0_9, %c0_10] : memref<32x16xf32, #tpu.memory_space<vmem>>, vector<32x16xf32>
    %c0_11 = arith.constant 0 : index
    %c0_12 = arith.constant 0 : index
    %8 = vector.load %arg7[%c0_11, %c0_12] : memref<32x1xf32, #tpu.memory_space<vmem>>, vector<32x1xf32>
    %c0_13 = arith.constant 0 : index
    %c0_14 = arith.constant 0 : index
    %9 = vector.load %arg8[%c0_13, %c0_14] : memref<32x32xf32, #tpu.memory_space<vmem>>, vector<32x32xf32>
    %c0_15 = arith.constant 0 : index
    %c0_16 = arith.constant 0 : index
    %10 = vector.load %arg9[%c0_15, %c0_16] : memref<32x1xf32, #tpu.memory_space<vmem>>, vector<32x1xf32>
    %c0_17 = arith.constant 0 : index
    %c0_18 = arith.constant 0 : index
    %11 = vector.load %arg10[%c0_17, %c0_18] : memref<32x32xf32, #tpu.memory_space<vmem>>, vector<32x32xf32>
    %c0_19 = arith.constant 0 : index
    %c0_20 = arith.constant 0 : index
    %12 = vector.load %arg11[%c0_19, %c0_20] : memref<32x1xf32, #tpu.memory_space<vmem>>, vector<32x1xf32>
    %c0_21 = arith.constant 0 : index
    %c0_22 = arith.constant 0 : index
    %13 = vector.load %arg12[%c0_21, %c0_22] : memref<16x32xf32, #tpu.memory_space<vmem>>, vector<16x32xf32>
    %c0_23 = arith.constant 0 : index
    %c0_24 = arith.constant 0 : index
    %14 = vector.load %arg13[%c0_23, %c0_24] : memref<16x1xf32, #tpu.memory_space<vmem>>, vector<16x1xf32>
    %cst = arith.constant dense<0.000000e+00> : vector<32x16xf32>
    %15 = tpu.matmul %7, %2, %cst {dimension_numbers = #tpu.dot_dimension_numbers<[1], [0], [0], [1], [0, 0, 1, 1], [], []>} : vector<32x16xf32>, vector<16x16xf32>, vector<32x16xf32> -> vector<32x16xf32>
    %16 = vector.broadcast %8 : vector<32x1xf32> to vector<32x16xf32>
    %17 = arith.addf %15, %16 : vector<32x16xf32>
    %cst_25 = arith.constant 0.000000e+00 : f32
    %18 = vector.broadcast %cst_25 : f32 to vector<32x16xf32>
    %19 = arith.maximumf %17, %18 : vector<32x16xf32>
    %20 = vector.broadcast %6 : vector<32x1xf32> to vector<32x16xf32>
    %21 = arith.addf %19, %20 : vector<32x16xf32>
    %22 = vector.broadcast %10 : vector<32x1xf32> to vector<32x16xf32>
    %23 = arith.addf %21, %22 : vector<32x16xf32>
    %cst_26 = arith.constant dense<0.000000e+00> : vector<32x16xf32>
    %24 = tpu.matmul %9, %4, %cst_26 {dimension_numbers = #tpu.dot_dimension_numbers<[1], [0], [0], [1], [0, 0, 1, 1], [], []>} : vector<32x32xf32>, vector<32x16xf32>, vector<32x16xf32> -> vector<32x16xf32>
    %25 = arith.addf %23, %24 : vector<32x16xf32>
    %cst_27 = arith.constant dense<0.000000e+00> : vector<32x16xf32>
    %26 = tpu.matmul %11, %23, %cst_27 {dimension_numbers = #tpu.dot_dimension_numbers<[1], [0], [0], [1], [0, 0, 1, 1], [], []>} : vector<32x32xf32>, vector<32x16xf32>, vector<32x16xf32> -> vector<32x16xf32>
    %27 = vector.broadcast %12 : vector<32x1xf32> to vector<32x16xf32>
    %28 = arith.addf %26, %27 : vector<32x16xf32>
    %cst_28 = arith.constant 0.000000e+00 : f32
    %29 = vector.broadcast %cst_28 : f32 to vector<32x16xf32>
    %30 = arith.maximumf %28, %29 : vector<32x16xf32>
    %cst_29 = arith.constant dense<0.000000e+00> : vector<32x16xf32>
    %31 = tpu.matmul %11, %25, %cst_29 {dimension_numbers = #tpu.dot_dimension_numbers<[1], [0], [0], [1], [0, 0, 1, 1], [], []>} : vector<32x32xf32>, vector<32x16xf32>, vector<32x16xf32> -> vector<32x16xf32>
    %32 = vector.broadcast %12 : vector<32x1xf32> to vector<32x16xf32>
    %33 = arith.addf %31, %32 : vector<32x16xf32>
    %cst_30 = arith.constant 0.000000e+00 : f32
    %34 = vector.broadcast %cst_30 : f32 to vector<32x16xf32>
    %35 = arith.maximumf %33, %34 : vector<32x16xf32>
    %36 = arith.subf %35, %30 : vector<32x16xf32>
    %37 = vector.broadcast %0 : f32 to vector<32x16xf32>
    %38 = arith.mulf %37, %36 : vector<32x16xf32>
    %39 = arith.addf %30, %38 : vector<32x16xf32>
    %cst_31 = arith.constant dense<0.000000e+00> : vector<16x16xf32>
    %40 = tpu.matmul %13, %39, %cst_31 {dimension_numbers = #tpu.dot_dimension_numbers<[1], [0], [0], [1], [0, 0, 1, 1], [], []>} : vector<16x32xf32>, vector<32x16xf32>, vector<16x16xf32> -> vector<16x16xf32>
    %41 = vector.broadcast %14 : vector<16x1xf32> to vector<16x16xf32>
    %42 = arith.addf %40, %41 : vector<16x16xf32>
    %c0_32 = arith.constant 0 : index
    %c0_33 = arith.constant 0 : index
    %c0_34 = arith.constant 0 : index
    %43 = vector.load %arg14[%c0_32, %c0_33, %c0_34] : memref<1x16x16xf32, #tpu.memory_space<vmem>>, vector<1x16x16xf32>
    %44 = vector.shape_cast %43 : vector<1x16x16xf32> to vector<16x16xf32>
    %45 = vector.shape_cast %42 : vector<16x16xf32> to vector<1x16x16xf32>
    tpu.vector_store %arg14[%c0_32, %c0_33, %c0_34], %45 {strides = array<i32>} : memref<1x16x16xf32, #tpu.memory_space<vmem>>, vector<1x16x16xf32>,
    return
  }
  func.func @transform_0(%arg0: i32, %arg1: i32) -> i32 {
    %c0_i32 = arith.constant 0 : i32
    %c0_i32_0 = arith.constant 0 : i32
    return %c0_i32 : i32
  }
  func.func @transform_1(%arg0: i32, %arg1: i32) -> (i32, i32, i32) {
    %c0_i32 = arith.constant 0 : i32
    %c0_i32_0 = arith.constant 0 : i32
    return %arg0, %c0_i32, %arg1 : i32, i32, i32
  }
  func.func @transform_2(%arg0: i32, %arg1: i32) -> (i32, i32, i32) {
    %c0_i32 = arith.constant 0 : i32
    %c0_i32_0 = arith.constant 0 : i32
    return %arg0, %c0_i32, %arg1 : i32, i32, i32
  }
  func.func @transform_3(%arg0: i32, %arg1: i32) -> (i32, i32, i32) {
    %c0_i32 = arith.constant 0 : i32
    %c0_i32_0 = arith.constant 0 : i32
    %c0_i32_1 = arith.constant 0 : i32
    return %arg0, %c0_i32, %c0_i32_0 : i32, i32, i32
  }
  func.func @transform_4(%arg0: i32, %arg1: i32) -> (i32, i32) {
    %c0_i32 = arith.constant 0 : i32
    %c0_i32_0 = arith.constant 0 : i32
    %c0_i32_1 = arith.constant 0 : i32
    return %c0_i32, %c0_i32_0 : i32, i32
  }
  func.func @transform_5(%arg0: i32, %arg1: i32) -> (i32, i32) {
    %c0_i32 = arith.constant 0 : i32
    %c0_i32_0 = arith.constant 0 : i32
    %c0_i32_1 = arith.constant 0 : i32
    return %c0_i32, %c0_i32_0 : i32, i32
  }
  func.func @transform_6(%arg0: i32, %arg1: i32) -> (i32, i32) {
    %c0_i32 = arith.constant 0 : i32
    %c0_i32_0 = arith.constant 0 : i32
    %c0_i32_1 = arith.constant 0 : i32
    return %c0_i32, %c0_i32_0 : i32, i32
  }
  func.func @transform_7(%arg0: i32, %arg1: i32) -> (i32, i32) {
    %c0_i32 = arith.constant 0 : i32
    %c0_i32_0 = arith.constant 0 : i32
    %c0_i32_1 = arith.constant 0 : i32
    return %c0_i32, %c0_i32_0 : i32, i32
  }
  func.func @transform_8(%arg0: i32, %arg1: i32) -> (i32, i32) {
    %c0_i32 = arith.constant 0 : i32
    %c0_i32_0 = arith.constant 0 : i32
    %c0_i32_1 = arith.constant 0 : i32
    return %c0_i32, %c0_i32_0 : i32, i32
  }
  func.func @transform_9(%arg0: i32, %arg1: i32) -> (i32, i32) {
    %c0_i32 = arith.constant 0 : i32
    %c0_i32_0 = arith.constant 0 : i32
    %c0_i32_1 = arith.constant 0 : i32
    return %c0_i32, %c0_i32_0 : i32, i32
  }
  func.func @transform_10(%arg0: i32, %arg1: i32) -> (i32, i32) {
    %c0_i32 = arith.constant 0 : i32
    %c0_i32_0 = arith.constant 0 : i32
    %c0_i32_1 = arith.constant 0 : i32
    return %c0_i32, %c0_i32_0 : i32, i32
  }
  func.func @transform_11(%arg0: i32, %arg1: i32) -> (i32, i32) {
    %c0_i32 = arith.constant 0 : i32
    %c0_i32_0 = arith.constant 0 : i32
    %c0_i32_1 = arith.constant 0 : i32
    return %c0_i32, %c0_i32_0 : i32, i32
  }
  func.func @transform_12(%arg0: i32, %arg1: i32) -> (i32, i32, i32) {
    %c0_i32 = arith.constant 0 : i32
    %c0_i32_0 = arith.constant 0 : i32
    return %arg0, %c0_i32, %arg1 : i32, i32, i32
  }
}

</mosaic_0001>

<llo_original>
// kernel: tpu_custom_call.1
$region0: #{tpu_custom_call.1}
  #allocation0 [shape = 'u32[]', space=smem, size = 0x4, offset = 0x4, fixed_abs, tag = 'smem constant byte address 0x4 - core index']
  #allocation1 [shape = 'u32[144,128]{1,0:T(1,128)}', space=vmem, size = 0x12000, scoped, tag = 'internal scratch']
  #allocation2 [shape = 'f32[1]{0:T(128)S(6)}', space=smem, size = 0x200, scoped, tag = 'scoped memory for tpu_custom_call.1']
  %s0 = inlined_call_operand.<no memory space> [shape: f32[1], index: 0, kind: input, shape index: {}]
  %s1 = inlined_call_operand.vmem [shape: f32[2,16,16], index: 1, kind: input, shape index: {}]
  %s2 = inlined_call_operand.vmem [shape: f32[2,32,16], index: 2, kind: input, shape index: {}]
  %s3 = inlined_call_operand.vmem [shape: f32[2,32,1], index: 3, kind: input, shape index: {}]
  %s4 = inlined_call_operand.vmem [shape: f32[32,16], index: 4, kind: input, shape index: {}]
  %s5 = inlined_call_operand.vmem [shape: f32[32,1], index: 5, kind: input, shape index: {}]
  %s6 = inlined_call_operand.vmem [shape: f32[32,32], index: 6, kind: input, shape index: {}]
  %s7 = inlined_call_operand.vmem [shape: f32[32,1], index: 7, kind: input, shape index: {}]
  %s8 = inlined_call_operand.vmem [shape: f32[32,32], index: 8, kind: input, shape index: {}]
  %s9 = inlined_call_operand.vmem [shape: f32[32,1], index: 9, kind: input, shape index: {}]
  %s10 = inlined_call_operand.vmem [shape: f32[16,32], index: 10, kind: input, shape index: {}]
  %s11 = inlined_call_operand.vmem [shape: f32[16,1], index: 11, kind: input, shape index: {}]
  %s12 = inlined_call_operand.hbm [shape: f32[2,16,16], index: 12, kind: output, shape index: {}]
  %s13 = sld [smem:[#allocation0]]
  $region81: #{tpu_custom_call.1} parent=0
    _
  %s15 = ssub.s32 1, %s13
  %s16 = scalar_select 0, %s15, %s13
  %17 = sst [smem:[#allocation2]] %s0
  $region1: #{tpu_custom_call.1} parent=0
    #allocation3 [shape = 'u8[16384]{0}', space=vmem, size = 0x4000, scoped, tag = 'output window, operand 0']
    #allocation4 [shape = 's32[2]{0}', space=sflag, size = 0x8, scoped, tag = 'scoped memory for tpu_custom_call.1']
    %18 = vsyncpa [#allocation4], 0
    %s19 = scalar_lea.sflag [#allocation4], 1
    %20 = vsyncpa %s19, 0
    loop: start=0, step=1, limit=4
    $region2: #{tpu_custom_call.1} parent=1 // loop_pre_header
      _
    $region3: #{tpu_custom_call.1} parent=1 // loop_header
      %s22 = sphi 0, %s26
      %p23 = scmp.ge.s32.totalorder %s22, 4
      %s29 = sphi 0, %s41
      %s30 = sphi 0, %s37
      %s31 = sphi 0, %s29
      %s32 = sphi 0, %s30
      %s33 = sphi 0, %s31
      %s34 = sphi 0, %s32
      %s42 = sphi 0, %s42
      %s44 = sphi 0, %s42
      %s45 = sphi 0, %s44
      %s59 = sphi 0, %s45
      %s67 = sphi 0, %s69
      %s70 = sphi 0, %s67
      %s71 = sphi 0, %s70
      %s87 = sphi 0, %s71
      %s95 = sphi 0, %s97
      %s98 = sphi 0, %s95
      %s99 = sphi 0, %s98
      %s115 = sphi 0, %s99
      %s121 = sphi 0, %s123
      %s124 = sphi 0, %s121
      %s125 = sphi 0, %s124
      %s141 = sphi 0, %s125
      %s145 = sphi 0, %s145
      %s147 = sphi 0, %s145
      %s148 = sphi 0, %s147
      %s162 = sphi 0, %s148
      %s166 = sphi 0, %s166
      %s168 = sphi 0, %s166
      %s169 = sphi 0, %s168
      %s183 = sphi 0, %s169
      %s187 = sphi 0, %s187
      %s189 = sphi 0, %s187
      %s190 = sphi 0, %s189
      %s204 = sphi 0, %s190
      %s208 = sphi 0, %s208
      %s210 = sphi 0, %s208
      %s211 = sphi 0, %s210
      %s225 = sphi 0, %s211
      %s229 = sphi 0, %s229
      %s231 = sphi 0, %s229
      %s232 = sphi 0, %s231
      %s246 = sphi 0, %s232
      %s250 = sphi 0, %s250
      %s252 = sphi 0, %s250
      %s253 = sphi 0, %s252
      %s267 = sphi 0, %s253
      %s271 = sphi 0, %s271
      %s273 = sphi 0, %s271
      %s274 = sphi 0, %s273
      %s288 = sphi 0, %s274
      %s292 = sphi 0, %s292
      %s294 = sphi 0, %s292
      %s295 = sphi 0, %s294
      %s309 = sphi 0, %s295
      %s317 = sphi 0, %s319
      %s320 = sphi 0, %s317
      %s321 = sphi 0, %s320
      %s337 = sphi 0, %s321
    $region4: #{tpu_custom_call.1} parent=1 // loop_header_branch
      %25 = sbr.rel (%p23) target = $region8
    $region5: #{tpu_custom_call.1} parent=1 // loop_body
      %s27 = ssub.s32 %s22, 1
      %s28 = ssub.s32 %s22, 2
      %s35 = sadd.s32 1, %s30
      %p36 = scmp.ge.s32.totalorder %s35, 1
      %s37 = scalar_select %p36, 0, %s35
      %s38 = sadd.s32 1, %s29
      %s39 = scalar_select %p36, %s38, %s29
      %p40 = scmp.ge.s32.totalorder %s39, 2
      %s41 = scalar_select %p40, 0, %s39
      %s43 = sadd.s32 %s42, 1
      %p46 = scmp.eq.s32.totalorder %s22, 1
      %p47 = scmp.ne.s32.totalorder %s42, %s44
      %p48 = scmp.eq.s32.totalorder %s22, 0
      %p49 = por %p47, %p48
      %p50 = scmp.ne.s32.totalorder %s42, %s44
      %p51 = scmp.eq.s32.totalorder %s27, 1
      %p52 = por %p50, %p51
      %p53 = scmp.ne.s32.totalorder %s44, %s45
      %p54 = scmp.eq.s32.totalorder %s27, 0
      %p55 = por %p53, %p54
      %p56 = scmp.ne.s32.totalorder %s44, %s45
      %p57 = scmp.eq.s32.totalorder %s28, 1
      %p58 = por %p56, %p57
      %p60 = scmp.ne.s32.totalorder %s45, %s59
      %p61 = scmp.eq.s32.totalorder %s28, 0
      %p62 = por %p60, %p61
      %s63 = ssub.s32 %s29, %s41
      %s64 = ssub.s32 %s30, %s37
      %s65 = sor.u32 %s63, %s64
      %p66 = scmp.eq.s32.totalorder %s65, 0
      %s68 = sadd.s32 %s67, 1
      %s69 = scalar_select %p66, %s67, %s68
      %p72 = pneg %p66
      %p73 = scmp.eq.s32.totalorder %s22, 1
      %p74 = por %p72, %p73
      %p75 = scmp.ne.s32.totalorder %s67, %s70
      %p76 = scmp.eq.s32.totalorder %s22, 0
      %p77 = por %p75, %p76
      %p78 = scmp.ne.s32.totalorder %s67, %s70
      %p79 = scmp.eq.s32.totalorder %s27, 1
      %p80 = por %p78, %p79
      %p81 = scmp.ne.s32.totalorder %s70, %s71
      %p82 = scmp.eq.s32.totalorder %s27, 0
      %p83 = por %p81, %p82
      %p84 = scmp.ne.s32.totalorder %s70, %s71
      %p85 = scmp.eq.s32.totalorder %s28, 1
      %p86 = por %p84, %p85
      %p88 = scmp.ne.s32.totalorder %s71, %s87
      %p89 = scmp.eq.s32.totalorder %s28, 0
      %p90 = por %p88, %p89
      %s91 = ssub.s32 %s29, %s41
      %s92 = ssub.s32 %s30, %s37
      %s93 = sor.u32 %s91, %s92
      %p94 = scmp.eq.s32.totalorder %s93, 0
      %s96 = sadd.s32 %s95, 1
      %s97 = scalar_select %p94, %s95, %s96
      %p100 = pneg %p94
      %p101 = scmp.eq.s32.totalorder %s22, 1
      %p102 = por %p100, %p101
      %p103 = scmp.ne.s32.totalorder %s95, %s98
      %p104 = scmp.eq.s32.totalorder %s22, 0
      %p105 = por %p103, %p104
      %p106 = scmp.ne.s32.totalorder %s95, %s98
      %p107 = scmp.eq.s32.totalorder %s27, 1
      %p108 = por %p106, %p107
      %p109 = scmp.ne.s32.totalorder %s98, %s99
      %p110 = scmp.eq.s32.totalorder %s27, 0
      %p111 = por %p109, %p110
      %p112 = scmp.ne.s32.totalorder %s98, %s99
      %p113 = scmp.eq.s32.totalorder %s28, 1
      %p114 = por %p112, %p113
      %p116 = scmp.ne.s32.totalorder %s99, %s115
      %p117 = scmp.eq.s32.totalorder %s28, 0
      %p118 = por %p116, %p117
      %s119 = ssub.s32 %s29, %s41
      %p120 = scmp.eq.s32.totalorder %s119, 0
      %s122 = sadd.s32 %s121, 1
      %s123 = scalar_select %p120, %s121, %s122
      %p126 = pneg %p120
      %p127 = scmp.eq.s32.totalorder %s22, 1
      %p128 = por %p126, %p127
      %p129 = scmp.ne.s32.totalorder %s121, %s124
      %p130 = scmp.eq.s32.totalorder %s22, 0
      %p131 = por %p129, %p130
      %p132 = scmp.ne.s32.totalorder %s121, %s124
      %p133 = scmp.eq.s32.totalorder %s27, 1
      %p134 = por %p132, %p133
      %p135 = scmp.ne.s32.totalorder %s124, %s125
      %p136 = scmp.eq.s32.totalorder %s27, 0
      %p137 = por %p135, %p136
      %p138 = scmp.ne.s32.totalorder %s124, %s125
      %p139 = scmp.eq.s32.totalorder %s28, 1
      %p140 = por %p138, %p139
      %p142 = scmp.ne.s32.totalorder %s125, %s141
      %p143 = scmp.eq.s32.totalorder %s28, 0
      %p144 = por %p142, %p143
      %s146 = sadd.s32 %s145, 1
      %p149 = scmp.eq.s32.totalorder %s22, 1
      %p150 = scmp.ne.s32.totalorder %s145, %s147
      %p151 = scmp.eq.s32.totalorder %s22, 0
      %p152 = por %p150, %p151
      %p153 = scmp.ne.s32.totalorder %s145, %s147
      %p154 = scmp.eq.s32.totalorder %s27, 1
      %p155 = por %p153, %p154
      %p156 = scmp.ne.s32.totalorder %s147, %s148
      %p157 = scmp.eq.s32.totalorder %s27, 0
      %p158 = por %p156, %p157
      %p159 = scmp.ne.s32.totalorder %s147, %s148
      %p160 = scmp.eq.s32.totalorder %s28, 1
      %p161 = por %p159, %p160
      %p163 = scmp.ne.s32.totalorder %s148, %s162
      %p164 = scmp.eq.s32.totalorder %s28, 0
      %p165 = por %p163, %p164
      %s167 = sadd.s32 %s166, 1
      %p170 = scmp.eq.s32.totalorder %s22, 1
      %p171 = scmp.ne.s32.totalorder %s166, %s168
      %p172 = scmp.eq.s32.totalorder %s22, 0
      %p173 = por %p171, %p172
      %p174 = scmp.ne.s32.totalorder %s166, %s168
      %p175 = scmp.eq.s32.totalorder %s27, 1
      %p176 = por %p174, %p175
      %p177 = scmp.ne.s32.totalorder %s168, %s169
      %p178 = scmp.eq.s32.totalorder %s27, 0
      %p179 = por %p177, %p178
      %p180 = scmp.ne.s32.totalorder %s168, %s169
      %p181 = scmp.eq.s32.totalorder %s28, 1
      %p182 = por %p180, %p181
      %p184 = scmp.ne.s32.totalorder %s169, %s183
      %p185 = scmp.eq.s32.totalorder %s28, 0
      %p186 = por %p184, %p185
      %s188 = sadd.s32 %s187, 1
      %p191 = scmp.eq.s32.totalorder %s22, 1
      %p192 = scmp.ne.s32.totalorder %s187, %s189
      %p193 = scmp.eq.s32.totalorder %s22, 0
      %p194 = por %p192, %p193
      %p195 = scmp.ne.s32.totalorder %s187, %s189
      %p196 = scmp.eq.s32.totalorder %s27, 1
      %p197 = por %p195, %p196
      %p198 = scmp.ne.s32.totalorder %s189, %s190
      %p199 = scmp.eq.s32.totalorder %s27, 0
      %p200 = por %p198, %p199
      %p201 = scmp.ne.s32.totalorder %s189, %s190
      %p202 = scmp.eq.s32.totalorder %s28, 1
      %p203 = por %p201, %p202
      %p205 = scmp.ne.s32.totalorder %s190, %s204
      %p206 = scmp.eq.s32.totalorder %s28, 0
      %p207 = por %p205, %p206
      %s209 = sadd.s32 %s208, 1
      %p212 = scmp.eq.s32.totalorder %s22, 1
      %p213 = scmp.ne.s32.totalorder %s208, %s210
      %p214 = scmp.eq.s32.totalorder %s22, 0
      %p215 = por %p213, %p214
      %p216 = scmp.ne.s32.totalorder %s208, %s210
      %p217 = scmp.eq.s32.totalorder %s27, 1
      %p218 = por %p216, %p217
      %p219 = scmp.ne.s32.totalorder %s210, %s211
      %p220 = scmp.eq.s32.totalorder %s27, 0
      %p221 = por %p219, %p220
      %p222 = scmp.ne.s32.totalorder %s210, %s211
      %p223 = scmp.eq.s32.totalorder %s28, 1
      %p224 = por %p222, %p223
      %p226 = scmp.ne.s32.totalorder %s211, %s225
      %p227 = scmp.eq.s32.totalorder %s28, 0
      %p228 = por %p226, %p227
      %s230 = sadd.s32 %s229, 1
      %p233 = scmp.eq.s32.totalorder %s22, 1
      %p234 = scmp.ne.s32.totalorder %s229, %s231
      %p235 = scmp.eq.s32.totalorder %s22, 0
      %p236 = por %p234, %p235
      %p237 = scmp.ne.s32.totalorder %s229, %s231
      %p238 = scmp.eq.s32.totalorder %s27, 1
      %p239 = por %p237, %p238
      %p240 = scmp.ne.s32.totalorder %s231, %s232
      %p241 = scmp.eq.s32.totalorder %s27, 0
      %p242 = por %p240, %p241
      %p243 = scmp.ne.s32.totalorder %s231, %s232
      %p244 = scmp.eq.s32.totalorder %s28, 1
      %p245 = por %p243, %p244
      %p247 = scmp.ne.s32.totalorder %s232, %s246
      %p248 = scmp.eq.s32.totalorder %s28, 0
      %p249 = por %p247, %p248
      %s251 = sadd.s32 %s250, 1
      %p254 = scmp.eq.s32.totalorder %s22, 1
      %p255 = scmp.ne.s32.totalorder %s250, %s252
      %p256 = scmp.eq.s32.totalorder %s22, 0
      %p257 = por %p255, %p256
      %p258 = scmp.ne.s32.totalorder %s250, %s252
      %p259 = scmp.eq.s32.totalorder %s27, 1
      %p260 = por %p258, %p259
      %p261 = scmp.ne.s32.totalorder %s252, %s253
      %p262 = scmp.eq.s32.totalorder %s27, 0
      %p263 = por %p261, %p262
      %p264 = scmp.ne.s32.totalorder %s252, %s253
      %p265 = scmp.eq.s32.totalorder %s28, 1
      %p266 = por %p264, %p265
      %p268 = scmp.ne.s32.totalorder %s253, %s267
      %p269 = scmp.eq.s32.totalorder %s28, 0
      %p270 = por %p268, %p269
      %s272 = sadd.s32 %s271, 1
      %p275 = scmp.eq.s32.totalorder %s22, 1
      %p276 = scmp.ne.s32.totalorder %s271, %s273
      %p277 = scmp.eq.s32.totalorder %s22, 0
      %p278 = por %p276, %p277
      %p279 = scmp.ne.s32.totalorder %s271, %s273
      %p280 = scmp.eq.s32.totalorder %s27, 1
      %p281 = por %p279, %p280
      %p282 = scmp.ne.s32.totalorder %s273, %s274
      %p283 = scmp.eq.s32.totalorder %s27, 0
      %p284 = por %p282, %p283
      %p285 = scmp.ne.s32.totalorder %s273, %s274
      %p286 = scmp.eq.s32.totalorder %s28, 1
      %p287 = por %p285, %p286
      %p289 = scmp.ne.s32.totalorder %s274, %s288
      %p290 = scmp.eq.s32.totalorder %s28, 0
      %p291 = por %p289, %p290
      %s293 = sadd.s32 %s292, 1
      %p296 = scmp.eq.s32.totalorder %s22, 1
      %p297 = scmp.ne.s32.totalorder %s292, %s294
      %p298 = scmp.eq.s32.totalorder %s22, 0
      %p299 = por %p297, %p298
      %p300 = scmp.ne.s32.totalorder %s292, %s294
      %p301 = scmp.eq.s32.totalorder %s27, 1
      %p302 = por %p300, %p301
      %p303 = scmp.ne.s32.totalorder %s294, %s295
      %p304 = scmp.eq.s32.totalorder %s27, 0
      %p305 = por %p303, %p304
      %p306 = scmp.ne.s32.totalorder %s294, %s295
      %p307 = scmp.eq.s32.totalorder %s28, 1
      %p308 = por %p306, %p307
      %p310 = scmp.ne.s32.totalorder %s295, %s309
      %p311 = scmp.eq.s32.totalorder %s28, 0
      %p312 = por %p310, %p311
      %s313 = ssub.s32 %s29, %s41
      %s314 = ssub.s32 %s30, %s37
      %s315 = sor.u32 %s313, %s314
      %p316 = scmp.eq.s32.totalorder %s315, 0
      %s318 = sadd.s32 %s317, 1
      %s319 = scalar_select %p316, %s317, %s318
      %p322 = pneg %p316
      %p323 = scmp.eq.s32.totalorder %s22, 1
      %p324 = por %p322, %p323
      %p325 = scmp.ne.s32.totalorder %s317, %s320
      %p326 = scmp.eq.s32.totalorder %s22, 0
      %p327 = por %p325, %p326
      %p328 = scmp.ne.s32.totalorder %s317, %s320
      %p329 = scmp.eq.s32.totalorder %s27, 1
      %p330 = por %p328, %p329
      %p331 = scmp.ne.s32.totalorder %s320, %s321
      %p332 = scmp.eq.s32.totalorder %s27, 0
      %p333 = por %p331, %p332
      %p334 = scmp.ne.s32.totalorder %s320, %s321
      %p335 = scmp.eq.s32.totalorder %s28, 1
      %p336 = por %p334, %p335
      %p338 = scmp.ne.s32.totalorder %s321, %s337
      %p339 = scmp.eq.s32.totalorder %s28, 0
      %p340 = por %p338, %p339
      %p341 = scmp.le.s32.totalorder 1, %s22
      %p342 = scmp.lt.s32.totalorder %s22, 3
      %p343 = pnand %p341, %p342
      %p344 = pneg %p343
      // Predicated region
      $region9: #{tpu_custom_call.1} parent=5 // pred_check
        _
      $region10: #{tpu_custom_call.1} parent=5 // pred_check_branch
        %346 = sbr.rel (%p343) target = $region12
      $region11: #{tpu_custom_call.1} parent=5 // pred_region
        %s347 = ssub.s32 %s22, 1
        // Predicated region
        $region13: #{tpu_custom_call.1} parent=11 // pred_check
          %p348 = pneg %p55
        $region14: #{tpu_custom_call.1} parent=11 // pred_check_branch
          %350 = sbr.rel (%p348) target = $region16
        $region15: #{tpu_custom_call.1} parent=11 // pred_region
          _
        $region16: #{tpu_custom_call.1} parent=11 // pred_fallthru
          _
        // Predicated region
        $region17: #{tpu_custom_call.1} parent=11 // pred_check
          %p351 = pneg %p158
        $region18: #{tpu_custom_call.1} parent=11 // pred_check_branch
          %353 = sbr.rel (%p351) target = $region20
        $region19: #{tpu_custom_call.1} parent=11 // pred_region
          _
        $region20: #{tpu_custom_call.1} parent=11 // pred_fallthru
          _
        // Predicated region
        $region21: #{tpu_custom_call.1} parent=11 // pred_check
          %p354 = pneg %p179
        $region22: #{tpu_custom_call.1} parent=11 // pred_check_branch
          %356 = sbr.rel (%p354) target = $region24
        $region23: #{tpu_custom_call.1} parent=11 // pred_region
          _
        $region24: #{tpu_custom_call.1} parent=11 // pred_fallthru
          _
        // Predicated region
        $region25: #{tpu_custom_call.1} parent=11 // pred_check
          %p357 = pneg %p200
        $region26: #{tpu_custom_call.1} parent=11 // pred_check_branch
          %359 = sbr.rel (%p357) target = $region28
        $region27: #{tpu_custom_call.1} parent=11 // pred_region
          _
        $region28: #{tpu_custom_call.1} parent=11 // pred_fallthru
          _
        // Predicated region
        $region29: #{tpu_custom_call.1} parent=11 // pred_check
          %p360 = pneg %p221
        $region30: #{tpu_custom_call.1} parent=11 // pred_check_branch
          %362 = sbr.rel (%p360) target = $region32
        $region31: #{tpu_custom_call.1} parent=11 // pred_region
          _
        $region32: #{tpu_custom_call.1} parent=11 // pred_fallthru
          _
        // Predicated region
        $region33: #{tpu_custom_call.1} parent=11 // pred_check
          %p363 = pneg %p242
        $region34: #{tpu_custom_call.1} parent=11 // pred_check_branch
          %365 = sbr.rel (%p363) target = $region36
        $region35: #{tpu_custom_call.1} parent=11 // pred_region
          _
        $region36: #{tpu_custom_call.1} parent=11 // pred_fallthru
          _
        // Predicated region
        $region37: #{tpu_custom_call.1} parent=11 // pred_check
          %p366 = pneg %p263
        $region38: #{tpu_custom_call.1} parent=11 // pred_check_branch
          %368 = sbr.rel (%p366) target = $region40
        $region39: #{tpu_custom_call.1} parent=11 // pred_region
          _
        $region40: #{tpu_custom_call.1} parent=11 // pred_fallthru
          _
        // Predicated region
        $region41: #{tpu_custom_call.1} parent=11 // pred_check
          %p369 = pneg %p284
        $region42: #{tpu_custom_call.1} parent=11 // pred_check_branch
          %371 = sbr.rel (%p369) target = $region44
        $region43: #{tpu_custom_call.1} parent=11 // pred_region
          _
        $region44: #{tpu_custom_call.1} parent=11 // pred_fallthru
          _
        // Predicated region
        $region45: #{tpu_custom_call.1} parent=11 // pred_check
          %p372 = pneg %p305
        $region46: #{tpu_custom_call.1} parent=11 // pred_check_branch
          %374 = sbr.rel (%p372) target = $region48
        $region47: #{tpu_custom_call.1} parent=11 // pred_region
          _
        $region48: #{tpu_custom_call.1} parent=11 // pred_fallthru
          _
      $region12: #{tpu_custom_call.1} parent=5 // pred_fallthru
        _
      %p375 = scmp.lt.s32.totalorder %s22, 2
      // Predicated region
      $region49: #{tpu_custom_call.1} parent=5 // pred_check
        %p376 = pneg %p375
      $region50: #{tpu_custom_call.1} parent=5 // pred_check_branch
        %378 = sbr.rel (%p376) target = $region52
      $region51: #{tpu_custom_call.1} parent=5 // pred_region
        // Predicated region
        $region53: #{tpu_custom_call.1} parent=51 // pred_check
          %p379 = pneg %p77
        $region54: #{tpu_custom_call.1} parent=51 // pred_check_branch
          %381 = sbr.rel (%p379) target = $region56
        $region55: #{tpu_custom_call.1} parent=51 // pred_region
          %p382 = scmp.lt.s32.totalorder %s29, 1
          %s383 = scalar_select %p382, %s29, 1
          %p384 = scmp.lt.s32.totalorder %s30, 0
          %s385 = scalar_select %p384, %s30, 0
          %s386 = smul.addr %s383, 2
          %s387 = sadd.s32 %s385, %s386
          %s388 = smul.addr %s387, 8
          %s389 = scalar_lea.vmem %s1, %s388
        $region56: #{tpu_custom_call.1} parent=51 // pred_fallthru
          _
        // Predicated region
        $region57: #{tpu_custom_call.1} parent=51 // pred_check
          %p390 = pneg %p105
        $region58: #{tpu_custom_call.1} parent=51 // pred_check_branch
          %392 = sbr.rel (%p390) target = $region60
        $region59: #{tpu_custom_call.1} parent=51 // pred_region
          %p393 = scmp.lt.s32.totalorder %s29, 1
          %s394 = scalar_select %p393, %s29, 1
          %p395 = scmp.lt.s32.totalorder %s30, 0
          %s396 = scalar_select %p395, %s30, 0
          %s397 = smul.addr %s394, 4
          %s398 = sadd.s32 %s396, %s397
          %s399 = smul.addr %s398, 8
          %s400 = scalar_lea.vmem %s2, %s399
        $region60: #{tpu_custom_call.1} parent=51 // pred_fallthru
          _
        // Predicated region
        $region61: #{tpu_custom_call.1} parent=51 // pred_check
          %p401 = pneg %p131
        $region62: #{tpu_custom_call.1} parent=51 // pred_check_branch
          %403 = sbr.rel (%p401) target = $region64
        $region63: #{tpu_custom_call.1} parent=51 // pred_region
          %p404 = scmp.lt.s32.totalorder %s29, 1
          %s405 = scalar_select %p404, %s29, 1
          %s406 = smul.addr %s405, 4
          %s407 = smul.addr %s406, 8
          %s408 = scalar_lea.vmem %s3, %s407
        $region64: #{tpu_custom_call.1} parent=51 // pred_fallthru
          _
      $region52: #{tpu_custom_call.1} parent=5 // pred_fallthru
        _
      %p409 = scmp.le.s32.totalorder 1, %s22
      %p410 = scmp.lt.s32.totalorder %s22, 3
      %p411 = pnand %p409, %p410
      %p412 = pneg %p411
      // Predicated region
      $region65: #{tpu_custom_call.1} parent=5 // pred_check
        _
      $region66: #{tpu_custom_call.1} parent=5 // pred_check_branch
        %414 = sbr.rel (%p411) target = $region68
      $region67: #{tpu_custom_call.1} parent=5 // pred_region
        %s415 = ssub.s32 %s22, 1
        %p416 = pneg %p55
        %p417 = pneg %p52
        %p418 = scmp.lt.s32.totalorder %s31, 1
        %s419 = scalar_select %p418, %s31, 1
        %p420 = scmp.lt.s32.totalorder %s32, 0
        %s421 = scalar_select %p420, %s32, 0
        %s422 = smul.addr %s419, 2
        %s423 = sadd.s32 %s421, %s422
        %s424 = smul.addr %s423, 8
        %s425 = scalar_lea.vmem %s1, %s424
        %p426 = pneg %p83
        %p427 = pneg %p80
        %p428 = scmp.lt.s32.totalorder %s31, 1
        %s429 = scalar_select %p428, %s31, 1
        %p430 = scmp.lt.s32.totalorder %s32, 0
        %s431 = scalar_select %p430, %s32, 0
        %s432 = smul.addr %s429, 4
        %s433 = sadd.s32 %s431, %s432
        %s434 = smul.addr %s433, 8
        %s435 = scalar_lea.vmem %s2, %s434
        %p436 = pneg %p111
        %p437 = pneg %p108
        %p438 = scmp.lt.s32.totalorder %s31, 1
        %s439 = scalar_select %p438, %s31, 1
        %s440 = smul.addr %s439, 4
        %s441 = smul.addr %s440, 8
        %s442 = scalar_lea.vmem %s3, %s441
        %p443 = pneg %p137
        %p444 = pneg %p134
        %p445 = pneg %p158
        %p446 = pneg %p155
        %p447 = pneg %p179
        %p448 = pneg %p176
        %p449 = pneg %p200
        %p450 = pneg %p197
        %p451 = pneg %p221
        %p452 = pneg %p218
        %p453 = pneg %p242
        %p454 = pneg %p239
        %p455 = pneg %p263
        %p456 = pneg %p260
        %p457 = pneg %p284
        %p458 = pneg %p281
        %p459 = pneg %p305
        %p460 = pneg %p302
        %p461 = pneg %p333
        %p462 = pneg %p330
        %s463 = sand.u32 %s320, 1
        %s464 = scalar_lea.sflag [#allocation4], %s463
        %s465 = sand.u32 %s320, 1
        %s466 = smul.addr %s465, 16
        %s467 = scalar_lea.vmem [#allocation3], %s466
        %p468 = scmp.lt.s32.totalorder %s31, 1
        %s469 = scalar_select %p468, %s31, 1
        %p470 = scmp.lt.s32.totalorder %s32, 0
        %s471 = scalar_select %p470, %s32, 0
        %s472 = smul.addr %s469, 2
        %s473 = sadd.s32 %s471, %s472
        %s474 = smul.addr %s473, 8
        %s475 = scalar_lea.vmem %s1, %s474
        %p476 = scmp.lt.s32.totalorder %s31, 1
        %s477 = scalar_select %p476, %s31, 1
        %p478 = scmp.lt.s32.totalorder %s32, 0
        %s479 = scalar_select %p478, %s32, 0
        %s480 = smul.addr %s477, 4
        %s481 = sadd.s32 %s479, %s480
        %s482 = smul.addr %s481, 8
        %s483 = scalar_lea.vmem %s2, %s482
        %p484 = scmp.lt.s32.totalorder %s31, 1
        %s485 = scalar_select %p484, %s31, 1
        %s486 = smul.addr %s485, 4
        %s487 = smul.addr %s486, 8
        %s488 = scalar_lea.vmem %s3, %s487
        %s489 = sld [smem:[#allocation2]]
        %v490 = vld [vmem:[%s475] sm:$0xff]
        %v491 = vld [vmem:[%s475 + $0x8] sm:$0xff]
        %v492 = vld [vmem:[%s483] sm:$0xff]
        %v493 = vld [vmem:[%s483 + $0x8] sm:$0xff]
        %v494 = vld [vmem:[%s483 + $0x10] sm:$0xff]
        %v495 = vld [vmem:[%s483 + $0x18] sm:$0xff]
        %v496 = vld [vmem:[%s488] sm:$0xff]
        %v497 = vld [vmem:[%s488 + $0x8] sm:$0xff]
        %v498 = vld [vmem:[%s488 + $0x10] sm:$0xff]
        %v499 = vld [vmem:[%s488 + $0x18] sm:$0xff]
        %v500 = vld [vmem:[%s4] sm:$0xff]
        %v501 = vld [vmem:[%s4 + $0x8] sm:$0xff]
        %v502 = vld [vmem:[%s4 + $0x10] sm:$0xff]
        %v503 = vld [vmem:[%s4 + $0x18] sm:$0xff]
        %v504 = vld [vmem:[%s5] sm:$0xff]
        %v505 = vld [vmem:[%s5 + $0x8] sm:$0xff]
        %v506 = vld [vmem:[%s5 + $0x10] sm:$0xff]
        %v507 = vld [vmem:[%s5 + $0x18] sm:$0xff]
        %v508 = vld [vmem:[%s6] sm:$0xff]
        %v509 = vld [vmem:[%s6 + $0x8] sm:$0xff]
        %v510 = vld [vmem:[%s6 + $0x10] sm:$0xff]
        %v511 = vld [vmem:[%s6 + $0x18] sm:$0xff]
        %v512 = vld [vmem:[%s7] sm:$0xff]
        %v513 = vld [vmem:[%s7 + $0x8] sm:$0xff]
        %v514 = vld [vmem:[%s7 + $0x10] sm:$0xff]
        %v515 = vld [vmem:[%s7 + $0x18] sm:$0xff]
        %v516 = vld [vmem:[%s8] sm:$0xff]
        %v517 = vld [vmem:[%s8 + $0x8] sm:$0xff]
        %v518 = vld [vmem:[%s8 + $0x10] sm:$0xff]
        %v519 = vld [vmem:[%s8 + $0x18] sm:$0xff]
        %v520 = vld [vmem:[%s9] sm:$0xff]
        %v521 = vld [vmem:[%s9 + $0x8] sm:$0xff]
        %v522 = vld [vmem:[%s9 + $0x10] sm:$0xff]
        %v523 = vld [vmem:[%s9 + $0x18] sm:$0xff]
        %v524 = vld [vmem:[%s10] sm:$0xff]
        %v525 = vld [vmem:[%s10 + $0x8] sm:$0xff]
        %v526 = vld [vmem:[%s11] sm:$0xff]
        %v527 = vld [vmem:[%s11 + $0x8] sm:$0xff]
        %529 = vset.pattern.permute.xlu0 0
        %530 = vperm.xlu0 %529, %v504
        %v531 = vpop.permute.xlu0 %530
        %534 = vset.pattern.permute.xlu0 0
        %535 = vperm.xlu0 %534, %v505
        %v536 = vpop.permute.xlu0 %535
        %539 = vset.pattern.permute.xlu0 0
        %540 = vperm.xlu0 %539, %v506
        %v541 = vpop.permute.xlu0 %540
        %544 = vset.pattern.permute.xlu0 0
        %545 = vperm.xlu0 %544, %v507
        %v546 = vpop.permute.xlu0 %545
        %vm548 = vcmask 130048
        %v550 = vsel %vm548, %v500, 0
        %v553 = vsel %vm548, %v501, 0
        %v556 = vsel %vm548, %v502, 0
        %v559 = vsel %vm548, %v503, 0
        %561 = vmatprep.subr.mxu0 0.0
        %562 = vmatpush1.msra.mxu0 0.0
        %563 = vmatprep.subr.mxu0 0.0
        %564 = vmatpush1.msra.mxu0 0.0
        %565 = vmatprep.subr.mxu0 0.0
        %566 = vmatpush1.msra.mxu0 0.0
        %567 = vmatprep.subr.mxu0 0.0
        %568 = vmatpush1.msra.mxu0 0.0
        %569 = vmatprep.subr.mxu0 0.0
        %570 = vmatpush1.msra.mxu0 0.0
        %571 = vmatprep.subr.mxu0 0.0
        %572 = vmatpush1.msra.mxu0 0.0
        %573 = vmatprep.subr.mxu0 0.0
        %574 = vmatpush1.msra.mxu0 0.0
        %575 = vmatprep.subr.mxu0 0.0
        %576 = vmatpush1.msra.mxu0 0.0
        %577 = vmatprep.subr.mxu0 0.0
        %578 = vmatpush1.msra.mxu0 0.0
        %579 = vmatprep.subr.mxu0 0.0
        %580 = vmatpush1.msra.mxu0 0.0
        %581 = vmatprep.subr.mxu0 0.0
        %582 = vmatpush1.msra.mxu0 0.0
        %583 = vmatprep.subr.mxu0 0.0
        %584 = vmatpush1.msra.mxu0 0.0
        %585 = vmatprep.subr.mxu0 0.0
        %586 = vmatpush1.msra.mxu0 0.0
        %587 = vmatprep.subr.mxu0 0.0
        %588 = vmatpush1.msra.mxu0 0.0
        %589 = vmatprep.subr.mxu0 0.0
        %590 = vmatpush1.msra.mxu0 %v491
        %591 = vmatprep.subr.mxu0 0.0
        %592 = vmatpush1.msra.mxu0 %v490
        %593 = vmatprep.subr.mxu0 0.0
        %594 = vmatpush2.msra.mxu0 0.0
        %595 = vmatprep.subr.mxu0 0.0
        %596 = vmatpush2.msra.mxu0 0.0
        %597 = vmatprep.subr.mxu0 0.0
        %598 = vmatpush2.msra.mxu0 0.0
        %599 = vmatprep.subr.mxu0 0.0
        %600 = vmatpush2.msra.mxu0 0.0
        %601 = vmatprep.subr.mxu0 0.0
        %602 = vmatpush2.msra.mxu0 0.0
        %603 = vmatprep.subr.mxu0 0.0
        %604 = vmatpush2.msra.mxu0 0.0
        %605 = vmatprep.subr.mxu0 0.0
        %606 = vmatpush2.msra.mxu0 0.0
        %607 = vmatprep.subr.mxu0 0.0
        %608 = vmatpush2.msra.mxu0 0.0
        %609 = vmatprep.subr.mxu0 0.0
        %610 = vmatpush2.msra.mxu0 0.0
        %611 = vmatprep.subr.mxu0 0.0
        %612 = vmatpush2.msra.mxu0 0.0
        %613 = vmatprep.subr.mxu0 0.0
        %614 = vmatpush2.msra.mxu0 0.0
        %615 = vmatprep.subr.mxu0 0.0
        %616 = vmatpush2.msra.mxu0 0.0
        %617 = vmatprep.subr.mxu0 0.0
        %618 = vmatpush2.msra.mxu0 0.0
        %619 = vmatprep.subr.mxu0 0.0
        %620 = vmatpush2.msra.mxu0 0.0
        %621 = vmatprep.subr.mxu0 0.0
        %622 = vmatpush2.msra.mxu0 0.0
        %623 = vmatprep.subr.mxu0 0.0
        %624 = vmatpush2.msra.mxu0 0.0
        %625 = vmatprep.mubr.f32.mxu0 0.0
        %626 = vmatmul.mubr.f32.gmra.mxu0 %v550
        %v627 = vpop.f32.mrf.mxu0
        %v628 = vadd.f32 %v531, %v627
        %v629 = vpop.f32.mrf.mxu0
        %630 = vmatprep.mubr.f32.mxu0 0.0
        %631 = vmatmul.mubr.f32.gmra.mxu0 %v553
        %v632 = vpop.f32.mrf.mxu0
        %v633 = vadd.f32 %v536, %v632
        %v634 = vpop.f32.mrf.mxu0
        %635 = vmatprep.mubr.f32.mxu0 0.0
        %636 = vmatmul.mubr.f32.gmra.mxu0 %v556
        %v637 = vpop.f32.mrf.mxu0
        %v638 = vadd.f32 %v541, %v637
        %v639 = vpop.f32.mrf.mxu0
        %640 = vmatprep.mubr.f32.mxu0 0.0
        %641 = vmatmul.mubr.f32.gmra.mxu0 %v559
        %v642 = vpop.f32.mrf.mxu0
        %v643 = vadd.f32 %v546, %v642
        %v644 = vpop.f32.mrf.mxu0
        %645 = vdwg.mxu0
        %v646 = vmax.f32 %v628, 0.0
        %v647 = vmax.f32 %v633, 0.0
        %v648 = vmax.f32 %v638, 0.0
        %v649 = vmax.f32 %v643, 0.0
        %651 = vset.pattern.permute.xlu0 0
        %652 = vperm.xlu0 %651, %v496
        %v653 = vpop.permute.xlu0 %652
        %656 = vset.pattern.permute.xlu0 0
        %657 = vperm.xlu0 %656, %v497
        %v658 = vpop.permute.xlu0 %657
        %661 = vset.pattern.permute.xlu0 0
        %662 = vperm.xlu0 %661, %v498
        %v663 = vpop.permute.xlu0 %662
        %666 = vset.pattern.permute.xlu0 0
        %667 = vperm.xlu0 %666, %v499
        %v668 = vpop.permute.xlu0 %667
        %v670 = vadd.f32 %v646, %v653
        %v671 = vadd.f32 %v647, %v658
        %v672 = vadd.f32 %v648, %v663
        %v673 = vadd.f32 %v649, %v668
        %675 = vset.pattern.permute.xlu0 0
        %676 = vperm.xlu0 %675, %v512
        %v677 = vpop.permute.xlu0 %676
        %680 = vset.pattern.permute.xlu0 0
        %681 = vperm.xlu0 %680, %v513
        %v682 = vpop.permute.xlu0 %681
        %685 = vset.pattern.permute.xlu0 0
        %686 = vperm.xlu0 %685, %v514
        %v687 = vpop.permute.xlu0 %686
        %690 = vset.pattern.permute.xlu0 0
        %691 = vperm.xlu0 %690, %v515
        %v692 = vpop.permute.xlu0 %691
        %v694 = vadd.f32 %v670, %v677
        %v695 = vadd.f32 %v671, %v682
        %v696 = vadd.f32 %v672, %v687
        %v697 = vadd.f32 %v673, %v692
        %vm698 = vcmask 261120
        %v700 = vsel %vm698, %v508, 0
        %v703 = vsel %vm698, %v509, 0
        %v706 = vsel %vm698, %v510, 0
        %v709 = vsel %vm698, %v511, 0
        %711 = vmatprep.subr.mxu0 0.0
        %712 = vmatpush1.msra.mxu0 0.0
        %713 = vmatprep.subr.mxu0 0.0
        %714 = vmatpush1.msra.mxu0 0.0
        %715 = vmatprep.subr.mxu0 0.0
        %716 = vmatpush1.msra.mxu0 0.0
        %717 = vmatprep.subr.mxu0 0.0
        %718 = vmatpush1.msra.mxu0 0.0
        %719 = vmatprep.subr.mxu0 0.0
        %720 = vmatpush1.msra.mxu0 0.0
        %721 = vmatprep.subr.mxu0 0.0
        %722 = vmatpush1.msra.mxu0 0.0
        %723 = vmatprep.subr.mxu0 0.0
        %724 = vmatpush1.msra.mxu0 0.0
        %725 = vmatprep.subr.mxu0 0.0
        %726 = vmatpush1.msra.mxu0 0.0
        %727 = vmatprep.subr.mxu0 0.0
        %728 = vmatpush1.msra.mxu0 0.0
        %729 = vmatprep.subr.mxu0 0.0
        %730 = vmatpush1.msra.mxu0 0.0
        %731 = vmatprep.subr.mxu0 0.0
        %732 = vmatpush1.msra.mxu0 0.0
        %733 = vmatprep.subr.mxu0 0.0
        %734 = vmatpush1.msra.mxu0 0.0
        %735 = vmatprep.subr.mxu0 0.0
        %736 = vmatpush1.msra.mxu0 %v495
        %737 = vmatprep.subr.mxu0 0.0
        %738 = vmatpush1.msra.mxu0 %v494
        %739 = vmatprep.subr.mxu0 0.0
        %740 = vmatpush1.msra.mxu0 %v493
        %741 = vmatprep.subr.mxu0 0.0
        %742 = vmatpush1.msra.mxu0 %v492
        %743 = vmatprep.subr.mxu0 0.0
        %744 = vmatpush2.msra.mxu0 0.0
        %745 = vmatprep.subr.mxu0 0.0
        %746 = vmatpush2.msra.mxu0 0.0
        %747 = vmatprep.subr.mxu0 0.0
        %748 = vmatpush2.msra.mxu0 0.0
        %749 = vmatprep.subr.mxu0 0.0
        %750 = vmatpush2.msra.mxu0 0.0
        %751 = vmatprep.subr.mxu0 0.0
        %752 = vmatpush2.msra.mxu0 0.0
        %753 = vmatprep.subr.mxu0 0.0
        %754 = vmatpush2.msra.mxu0 0.0
        %755 = vmatprep.subr.mxu0 0.0
        %756 = vmatpush2.msra.mxu0 0.0
        %757 = vmatprep.subr.mxu0 0.0
        %758 = vmatpush2.msra.mxu0 0.0
        %759 = vmatprep.subr.mxu0 0.0
        %760 = vmatpush2.msra.mxu0 0.0
        %761 = vmatprep.subr.mxu0 0.0
        %762 = vmatpush2.msra.mxu0 0.0
        %763 = vmatprep.subr.mxu0 0.0
        %764 = vmatpush2.msra.mxu0 0.0
        %765 = vmatprep.subr.mxu0 0.0
        %766 = vmatpush2.msra.mxu0 0.0
        %767 = vmatprep.subr.mxu0 0.0
        %768 = vmatpush2.msra.mxu0 0.0
        %769 = vmatprep.subr.mxu0 0.0
        %770 = vmatpush2.msra.mxu0 0.0
        %771 = vmatprep.subr.mxu0 0.0
        %772 = vmatpush2.msra.mxu0 0.0
        %773 = vmatprep.subr.mxu0 0.0
        %774 = vmatpush2.msra.mxu0 0.0
        %775 = vmatprep.mubr.f32.mxu0 0.0
        %776 = vmatmul.mubr.f32.gmra.mxu0 %v700
        %v777 = vpop.f32.mrf.mxu0
        %v778 = vadd.f32 0.0, %v777
        %v779 = vpop.f32.mrf.mxu0
        %780 = vmatprep.mubr.f32.mxu0 0.0
        %781 = vmatmul.mubr.f32.gmra.mxu0 %v703
        %v782 = vpop.f32.mrf.mxu0
        %v783 = vadd.f32 0.0, %v782
        %v784 = vpop.f32.mrf.mxu0
        %785 = vmatprep.mubr.f32.mxu0 0.0
        %786 = vmatmul.mubr.f32.gmra.mxu0 %v706
        %v787 = vpop.f32.mrf.mxu0
        %v788 = vadd.f32 0.0, %v787
        %v789 = vpop.f32.mrf.mxu0
        %790 = vmatprep.mubr.f32.mxu0 0.0
        %791 = vmatmul.mubr.f32.gmra.mxu0 %v709
        %v792 = vpop.f32.mrf.mxu0
        %v793 = vadd.f32 0.0, %v792
        %v794 = vpop.f32.mrf.mxu0
        %795 = vdwg.mxu0
        %v796 = vadd.f32 %v694, %v778
        %v797 = vadd.f32 %v695, %v783
        %v798 = vadd.f32 %v696, %v788
        %v799 = vadd.f32 %v697, %v793
        %801 = vset.pattern.permute.xlu0 0
        %802 = vperm.xlu0 %801, %v520
        %v803 = vpop.permute.xlu0 %802
        %806 = vset.pattern.permute.xlu0 0
        %807 = vperm.xlu0 %806, %v521
        %v808 = vpop.permute.xlu0 %807
        %811 = vset.pattern.permute.xlu0 0
        %812 = vperm.xlu0 %811, %v522
        %v813 = vpop.permute.xlu0 %812
        %816 = vset.pattern.permute.xlu0 0
        %817 = vperm.xlu0 %816, %v523
        %v818 = vpop.permute.xlu0 %817
        %v821 = vsel %vm698, %v516, 0
        %v824 = vsel %vm698, %v517, 0
        %v827 = vsel %vm698, %v518, 0
        %v830 = vsel %vm698, %v519, 0
        %832 = vmatprep.subr.mxu0 0.0
        %833 = vmatpush1.msra.mxu0 0.0
        %834 = vmatprep.subr.mxu0 0.0
        %835 = vmatpush1.msra.mxu0 0.0
        %836 = vmatprep.subr.mxu0 0.0
        %837 = vmatpush1.msra.mxu0 0.0
        %838 = vmatprep.subr.mxu0 0.0
        %839 = vmatpush1.msra.mxu0 0.0
        %840 = vmatprep.subr.mxu0 0.0
        %841 = vmatpush1.msra.mxu0 0.0
        %842 = vmatprep.subr.mxu0 0.0
        %843 = vmatpush1.msra.mxu0 0.0
        %844 = vmatprep.subr.mxu0 0.0
        %845 = vmatpush1.msra.mxu0 0.0
        %846 = vmatprep.subr.mxu0 0.0
        %847 = vmatpush1.msra.mxu0 0.0
        %848 = vmatprep.subr.mxu0 0.0
        %849 = vmatpush1.msra.mxu0 0.0
        %850 = vmatprep.subr.mxu0 0.0
        %851 = vmatpush1.msra.mxu0 0.0
        %852 = vmatprep.subr.mxu0 0.0
        %853 = vmatpush1.msra.mxu0 0.0
        %854 = vmatprep.subr.mxu0 0.0
        %855 = vmatpush1.msra.mxu0 0.0
        %856 = vmatprep.subr.mxu0 0.0
        %857 = vmatpush1.msra.mxu0 %v697
        %858 = vmatprep.subr.mxu0 0.0
        %859 = vmatpush1.msra.mxu0 %v696
        %860 = vmatprep.subr.mxu0 0.0
        %861 = vmatpush1.msra.mxu0 %v695
        %862 = vmatprep.subr.mxu0 0.0
        %863 = vmatpush1.msra.mxu0 %v694
        %864 = vmatprep.subr.mxu0 0.0
        %865 = vmatpush2.msra.mxu0 0.0
        %866 = vmatprep.subr.mxu0 0.0
        %867 = vmatpush2.msra.mxu0 0.0
        %868 = vmatprep.subr.mxu0 0.0
        %869 = vmatpush2.msra.mxu0 0.0
        %870 = vmatprep.subr.mxu0 0.0
        %871 = vmatpush2.msra.mxu0 0.0
        %872 = vmatprep.subr.mxu0 0.0
        %873 = vmatpush2.msra.mxu0 0.0
        %874 = vmatprep.subr.mxu0 0.0
        %875 = vmatpush2.msra.mxu0 0.0
        %876 = vmatprep.subr.mxu0 0.0
        %877 = vmatpush2.msra.mxu0 0.0
        %878 = vmatprep.subr.mxu0 0.0
        %879 = vmatpush2.msra.mxu0 0.0
        %880 = vmatprep.subr.mxu0 0.0
        %881 = vmatpush2.msra.mxu0 0.0
        %882 = vmatprep.subr.mxu0 0.0
        %883 = vmatpush2.msra.mxu0 0.0
        %884 = vmatprep.subr.mxu0 0.0
        %885 = vmatpush2.msra.mxu0 0.0
        %886 = vmatprep.subr.mxu0 0.0
        %887 = vmatpush2.msra.mxu0 0.0
        %888 = vmatprep.subr.mxu0 0.0
        %889 = vmatpush2.msra.mxu0 0.0
        %890 = vmatprep.subr.mxu0 0.0
        %891 = vmatpush2.msra.mxu0 0.0
        %892 = vmatprep.subr.mxu0 0.0
        %893 = vmatpush2.msra.mxu0 0.0
        %894 = vmatprep.subr.mxu0 0.0
        %895 = vmatpush2.msra.mxu0 0.0
        %896 = vmatprep.mubr.f32.mxu0 0.0
        %897 = vmatmul.mubr.f32.gmra.mxu0 %v821
        %v898 = vpop.f32.mrf.mxu0
        %v899 = vadd.f32 %v803, %v898
        %v900 = vpop.f32.mrf.mxu0
        %901 = vmatprep.mubr.f32.mxu0 0.0
        %902 = vmatmul.mubr.f32.gmra.mxu0 %v824
        %v903 = vpop.f32.mrf.mxu0
        %v904 = vadd.f32 %v808, %v903
        %v905 = vpop.f32.mrf.mxu0
        %906 = vmatprep.mubr.f32.mxu0 0.0
        %907 = vmatmul.mubr.f32.gmra.mxu0 %v827
        %v908 = vpop.f32.mrf.mxu0
        %v909 = vadd.f32 %v813, %v908
        %v910 = vpop.f32.mrf.mxu0
        %911 = vmatprep.mubr.f32.mxu0 0.0
        %912 = vmatmul.mubr.f32.gmra.mxu0 %v830
        %v913 = vpop.f32.mrf.mxu0
        %v914 = vadd.f32 %v818, %v913
        %v915 = vpop.f32.mrf.mxu0
        %916 = vdwg.mxu0
        %v917 = vmax.f32 %v899, 0.0
        %v918 = vmax.f32 %v904, 0.0
        %v919 = vmax.f32 %v909, 0.0
        %v920 = vmax.f32 %v914, 0.0
        %921 = vmatprep.subr.mxu0 0.0
        %922 = vmatpush1.msra.mxu0 0.0
        %923 = vmatprep.subr.mxu0 0.0
        %924 = vmatpush1.msra.mxu0 0.0
        %925 = vmatprep.subr.mxu0 0.0
        %926 = vmatpush1.msra.mxu0 0.0
        %927 = vmatprep.subr.mxu0 0.0
        %928 = vmatpush1.msra.mxu0 0.0
        %929 = vmatprep.subr.mxu0 0.0
        %930 = vmatpush1.msra.mxu0 0.0
        %931 = vmatprep.subr.mxu0 0.0
        %932 = vmatpush1.msra.mxu0 0.0
        %933 = vmatprep.subr.mxu0 0.0
        %934 = vmatpush1.msra.mxu0 0.0
        %935 = vmatprep.subr.mxu0 0.0
        %936 = vmatpush1.msra.mxu0 0.0
        %937 = vmatprep.subr.mxu0 0.0
        %938 = vmatpush1.msra.mxu0 0.0
        %939 = vmatprep.subr.mxu0 0.0
        %940 = vmatpush1.msra.mxu0 0.0
        %941 = vmatprep.subr.mxu0 0.0
        %942 = vmatpush1.msra.mxu0 0.0
        %943 = vmatprep.subr.mxu0 0.0
        %944 = vmatpush1.msra.mxu0 0.0
        %945 = vmatprep.subr.mxu0 0.0
        %946 = vmatpush1.msra.mxu0 %v799
        %947 = vmatprep.subr.mxu0 0.0
        %948 = vmatpush1.msra.mxu0 %v798
        %949 = vmatprep.subr.mxu0 0.0
        %950 = vmatpush1.msra.mxu0 %v797
        %951 = vmatprep.subr.mxu0 0.0
        %952 = vmatpush1.msra.mxu0 %v796
        %953 = vmatprep.subr.mxu0 0.0
        %954 = vmatpush2.msra.mxu0 0.0
        %955 = vmatprep.subr.mxu0 0.0
        %956 = vmatpush2.msra.mxu0 0.0
        %957 = vmatprep.subr.mxu0 0.0
        %958 = vmatpush2.msra.mxu0 0.0
        %959 = vmatprep.subr.mxu0 0.0
        %960 = vmatpush2.msra.mxu0 0.0
        %961 = vmatprep.subr.mxu0 0.0
        %962 = vmatpush2.msra.mxu0 0.0
        %963 = vmatprep.subr.mxu0 0.0
        %964 = vmatpush2.msra.mxu0 0.0
        %965 = vmatprep.subr.mxu0 0.0
        %966 = vmatpush2.msra.mxu0 0.0
        %967 = vmatprep.subr.mxu0 0.0
        %968 = vmatpush2.msra.mxu0 0.0
        %969 = vmatprep.subr.mxu0 0.0
        %970 = vmatpush2.msra.mxu0 0.0
        %971 = vmatprep.subr.mxu0 0.0
        %972 = vmatpush2.msra.mxu0 0.0
        %973 = vmatprep.subr.mxu0 0.0
        %974 = vmatpush2.msra.mxu0 0.0
        %975 = vmatprep.subr.mxu0 0.0
        %976 = vmatpush2.msra.mxu0 0.0
        %977 = vmatprep.subr.mxu0 0.0
        %978 = vmatpush2.msra.mxu0 0.0
        %979 = vmatprep.subr.mxu0 0.0
        %980 = vmatpush2.msra.mxu0 0.0
        %981 = vmatprep.subr.mxu0 0.0
        %982 = vmatpush2.msra.mxu0 0.0
        %983 = vmatprep.subr.mxu0 0.0
        %984 = vmatpush2.msra.mxu0 0.0
        %985 = vmatprep.mubr.f32.mxu0 0.0
        %986 = vmatmul.mubr.f32.gmra.mxu0 %v821
        %v987 = vpop.f32.mrf.mxu0
        %v988 = vadd.f32 %v803, %v987
        %v989 = vpop.f32.mrf.mxu0
        %990 = vmatprep.mubr.f32.mxu0 0.0
        %991 = vmatmul.mubr.f32.gmra.mxu0 %v824
        %v992 = vpop.f32.mrf.mxu0
        %v993 = vadd.f32 %v808, %v992
        %v994 = vpop.f32.mrf.mxu0
        %995 = vmatprep.mubr.f32.mxu0 0.0
        %996 = vmatmul.mubr.f32.gmra.mxu0 %v827
        %v997 = vpop.f32.mrf.mxu0
        %v998 = vadd.f32 %v813, %v997
        %v999 = vpop.f32.mrf.mxu0
        %1000 = vmatprep.mubr.f32.mxu0 0.0
        %1001 = vmatmul.mubr.f32.gmra.mxu0 %v830
        %v1002 = vpop.f32.mrf.mxu0
        %v1003 = vadd.f32 %v818, %v1002
        %v1004 = vpop.f32.mrf.mxu0
        %1005 = vdwg.mxu0
        %v1006 = vmax.f32 %v988, 0.0
        %v1007 = vmax.f32 %v993, 0.0
        %v1008 = vmax.f32 %v998, 0.0
        %v1009 = vmax.f32 %v1003, 0.0
        %v1010 = vsub.f32 %v1006, %v917
        %v1011 = vsub.f32 %v1007, %v918
        %v1012 = vsub.f32 %v1008, %v919
        %v1013 = vsub.f32 %v1009, %v920
        %v1014 = vstv %s489
        %v1015 = vmul.f32 %v1014, %v1010
        %v1016 = vmul.f32 %v1014, %v1011
        %v1017 = vmul.f32 %v1014, %v1012
        %v1018 = vmul.f32 %v1014, %v1013
        %v1019 = vadd.f32 %v917, %v1015
        %v1020 = vadd.f32 %v918, %v1016
        %v1021 = vadd.f32 %v919, %v1017
        %v1022 = vadd.f32 %v920, %v1018
        %1024 = vset.pattern.permute.xlu0 0
        %1025 = vperm.xlu0 %1024, %v526
        %v1026 = vpop.permute.xlu0 %1025
        %1029 = vset.pattern.permute.xlu0 0
        %1030 = vperm.xlu0 %1029, %v527
        %v1031 = vpop.permute.xlu0 %1030
        %v1034 = vsel %vm698, %v524, 0
        %v1037 = vsel %vm698, %v525, 0
        %1039 = vmatprep.subr.mxu0 0.0
        %1040 = vmatpush1.msra.mxu0 0.0
        %1041 = vmatprep.subr.mxu0 0.0
        %1042 = vmatpush1.msra.mxu0 0.0
        %1043 = vmatprep.subr.mxu0 0.0
        %1044 = vmatpush1.msra.mxu0 0.0
        %1045 = vmatprep.subr.mxu0 0.0
        %1046 = vmatpush1.msra.mxu0 0.0
        %1047 = vmatprep.subr.mxu0 0.0
        %1048 = vmatpush1.msra.mxu0 0.0
        %1049 = vmatprep.subr.mxu0 0.0
        %1050 = vmatpush1.msra.mxu0 0.0
        %1051 = vmatprep.subr.mxu0 0.0
        %1052 = vmatpush1.msra.mxu0 0.0
        %1053 = vmatprep.subr.mxu0 0.0
        %1054 = vmatpush1.msra.mxu0 0.0
        %1055 = vmatprep.subr.mxu0 0.0
        %1056 = vmatpush1.msra.mxu0 0.0
        %1057 = vmatprep.subr.mxu0 0.0
        %1058 = vmatpush1.msra.mxu0 0.0
        %1059 = vmatprep.subr.mxu0 0.0
        %1060 = vmatpush1.msra.mxu0 0.0
        %1061 = vmatprep.subr.mxu0 0.0
        %1062 = vmatpush1.msra.mxu0 0.0
        %1063 = vmatprep.subr.mxu0 0.0
        %1064 = vmatpush1.msra.mxu0 %v1022
        %1065 = vmatprep.subr.mxu0 0.0
        %1066 = vmatpush1.msra.mxu0 %v1021
        %1067 = vmatprep.subr.mxu0 0.0
        %1068 = vmatpush1.msra.mxu0 %v1020
        %1069 = vmatprep.subr.mxu0 0.0
        %1070 = vmatpush1.msra.mxu0 %v1019
        %1071 = vmatprep.subr.mxu0 0.0
        %1072 = vmatpush2.msra.mxu0 0.0
        %1073 = vmatprep.subr.mxu0 0.0
        %1074 = vmatpush2.msra.mxu0 0.0
        %1075 = vmatprep.subr.mxu0 0.0
        %1076 = vmatpush2.msra.mxu0 0.0
        %1077 = vmatprep.subr.mxu0 0.0
        %1078 = vmatpush2.msra.mxu0 0.0
        %1079 = vmatprep.subr.mxu0 0.0
        %1080 = vmatpush2.msra.mxu0 0.0
        %1081 = vmatprep.subr.mxu0 0.0
        %1082 = vmatpush2.msra.mxu0 0.0
        %1083 = vmatprep.subr.mxu0 0.0
        %1084 = vmatpush2.msra.mxu0 0.0
        %1085 = vmatprep.subr.mxu0 0.0
        %1086 = vmatpush2.msra.mxu0 0.0
        %1087 = vmatprep.subr.mxu0 0.0
        %1088 = vmatpush2.msra.mxu0 0.0
        %1089 = vmatprep.subr.mxu0 0.0
        %1090 = vmatpush2.msra.mxu0 0.0
        %1091 = vmatprep.subr.mxu0 0.0
        %1092 = vmatpush2.msra.mxu0 0.0
        %1093 = vmatprep.subr.mxu0 0.0
        %1094 = vmatpush2.msra.mxu0 0.0
        %1095 = vmatprep.subr.mxu0 0.0
        %1096 = vmatpush2.msra.mxu0 0.0
        %1097 = vmatprep.subr.mxu0 0.0
        %1098 = vmatpush2.msra.mxu0 0.0
        %1099 = vmatprep.subr.mxu0 0.0
        %1100 = vmatpush2.msra.mxu0 0.0
        %1101 = vmatprep.subr.mxu0 0.0
        %1102 = vmatpush2.msra.mxu0 0.0
        %1103 = vmatprep.mubr.f32.mxu0 0.0
        %1104 = vmatmul.mubr.f32.gmra.mxu0 %v1034
        %v1105 = vpop.f32.mrf.mxu0
        %v1106 = vadd.f32 %v1026, %v1105
        %v1107 = vpop.f32.mrf.mxu0
        %1108 = vmatprep.mubr.f32.mxu0 0.0
        %1109 = vmatmul.mubr.f32.gmra.mxu0 %v1037
        %v1110 = vpop.f32.mrf.mxu0
        %v1111 = vadd.f32 %v1031, %v1110
        %v1112 = vpop.f32.mrf.mxu0
        %1113 = vdwg.mxu0
        %1114 = vst.msk [vmem:[%s467] sm:$0xff] %vm548, %v1106
        %1115 = vst.msk [vmem:[%s467 + $0x8] sm:$0xff] %vm548, %v1111
        %s1116 = sand.u32 %s320, 1
        %s1117 = scalar_lea.sflag [#allocation4], %s1116
        %s1118 = sand.u32 %s320, 1
        %s1119 = smul.addr %s1118, 16
        %s1120 = scalar_lea.vmem [#allocation3], %s1119
        // Predicated region
        $region69: #{tpu_custom_call.1} parent=67 // pred_check
          %p1121 = pneg %p330
        $region70: #{tpu_custom_call.1} parent=67 // pred_check_branch
          %1123 = sbr.rel (%p1121) target = $region72
        $region71: #{tpu_custom_call.1} parent=67 // pred_region
          %s1125 = ssub.s32 256, 256
          %1126 = vsyncadd %s1117, %s1125
          %s1127 = smul.addr %s31, 2
          %s1128 = sadd.s32 %s32, %s1127
          %s1129 = smul.addr %s1128, 128
          %s1130 = scalar_lea.hbm %s12, %s1129
          %s1131 = sshll.u32 %s1120, 4
          %s1132 = int_to_ptr.vmem [resolvable:$true] %s1131
          %1137 = dma.vmem_to_hbm [thread:$0]  %s1132, 256, %s1130, %s1117, 128, 128, 8
        $region72: #{tpu_custom_call.1} parent=67 // pred_fallthru
          _
      $region68: #{tpu_custom_call.1} parent=5 // pred_fallthru
        _
      %p1138 = scmp.le.s32.totalorder 2, %s22
      // Predicated region
      $region73: #{tpu_custom_call.1} parent=5 // pred_check
        %p1139 = pneg %p1138
      $region74: #{tpu_custom_call.1} parent=5 // pred_check_branch
        %1141 = sbr.rel (%p1139) target = $region76
      $region75: #{tpu_custom_call.1} parent=5 // pred_region
        %s1142 = ssub.s32 %s22, 2
        // Predicated region
        $region77: #{tpu_custom_call.1} parent=75 // pred_check
          %p1143 = pneg %p336
        $region78: #{tpu_custom_call.1} parent=75 // pred_check_branch
          %1145 = sbr.rel (%p1143) target = $region80
        $region79: #{tpu_custom_call.1} parent=75 // pred_region
          %s1146 = sand.u32 %s321, 1
          %s1147 = scalar_lea.sflag [#allocation4], %s1146
          %s1148 = sand.u32 %s321, 1
          %s1149 = smul.addr %s1148, 16
          %s1150 = scalar_lea.vmem [#allocation3], %s1149
          %1151 = dma.done %s1147, 256
        $region80: #{tpu_custom_call.1} parent=75 // pred_fallthru
          _
      $region76: #{tpu_custom_call.1} parent=5 // pred_fallthru
        _
    $region6: #{tpu_custom_call.1} parent=1 // loop_footer
      %s26 = sadd.s32 1, %s22
    $region7: #{tpu_custom_call.1} parent=1 // loop_footer_branch
      %21 = sbr.rel target = $region3
    $region8: #{tpu_custom_call.1} parent=1 // loop_exit
      _
    %1152 = vsyncpa [#allocation4], 1
    %s1153 = scalar_lea.sflag [#allocation4], 1
    %1154 = vsyncpa %s1153, 1

</llo_original>
